<compile_context>
chip_gen: v6e
topology: v6e:2x2x1
jax: 0.10.0
libtpu: 0.0.40
codegen_flags: <defaults>
</compile_context>

<pallas_src>
import functools

import jax
import jax.numpy as jnp
from jax.experimental import pallas as pl
from jax.experimental.pallas import tpu as pltpu

_NEG_BIG = -1e30  # same masking value as the reference math


def _round_up(x: int, m: int) -> int:
    return (x + m - 1) // m * m


# ---------------------------------------------------------------------------
# Pass 1: normalize + positive logits
# ---------------------------------------------------------------------------
def _prep_kernel(zi_ref, zj_ref, zn_ref, pos_ref, *, inv_t):
    zi = zi_ref[...].astype(jnp.float32)
    zj = zj_ref[...].astype(jnp.float32)
    # 1 / max(||z||, 1e-8) via rsqrt (EUP slot) instead of sqrt + divide (VPU).
    ri = jax.lax.rsqrt(jnp.maximum(jnp.sum(zi * zi, axis=-1, keepdims=True), 1e-16))
    rj = jax.lax.rsqrt(jnp.maximum(jnp.sum(zj * zj, axis=-1, keepdims=True), 1e-16))
    zni = zi * ri
    znj = zj * rj
    zn_ref[0] = zni
    zn_ref[1] = znj
    # Positive logit of pair (i, i+B): cos(z_i[i], z_j[i]) / T — O(B*D) row dot.
    pos_ref[...] = jnp.sum(zni * znj, axis=-1, keepdims=True) * jnp.float32(inv_t)


def _pick_prep_tile(B: int, D: int) -> int:
    # Keep the handful of live (tb, D) f32 blocks to a few MiB each.
    cap = max(8, min(512, ((2 << 20) // max(1, 4 * D)) // 8 * 8))
    return B if B <= cap else cap


# ---------------------------------------------------------------------------
# Pass 2: tiled online logsumexp over the similarity matrix
# ---------------------------------------------------------------------------
def _lse_kernel(zq_ref, zk_ref, lse_ref, m_scr, l_scr, *, inv_t, tile, n_valid, n_pad):
    qi = pl.program_id(0)
    kj = pl.program_id(1)

    @pl.when(kj == 0)
    def _():
        m_scr[...] = jnp.full_like(m_scr, -jnp.inf)
        l_scr[...] = jnp.zeros_like(l_scr)

    # Fold 1/temperature into the small (TILE, D) query operand, not the NxN result.
    zq = zq_ref[...] * jnp.float32(inv_t)            # (TILE, D)
    zk = zk_ref[...]                                 # (TILE, D)
    # Contract the lane (feature) dim of both operands: A @ B.T without a
    # transposed key copy.
    s = jax.lax.dot_general(zq, zk, (((1,), (1,)), ((), ())),
                            preferred_element_type=jnp.float32)  # (TILE, TILE)

    # Tile-local masking only: self-similarity (k == i) and padded key columns.
    row_g = qi * tile + jax.lax.broadcasted_iota(jnp.int32, s.shape, 0)
    col_g = kj * tile + jax.lax.broadcasted_iota(jnp.int32, s.shape, 1)
    mask = row_g == col_g
    if n_pad > n_valid:                              # static: emitted only if padded
        mask = mask | (col_g >= n_valid)
    s = jnp.where(mask, jnp.float32(_NEG_BIG), s)

    # Online logsumexp update (single exp pass per element).
    m_prev = m_scr[...]
    m_new = jnp.maximum(m_prev, jnp.max(s, axis=-1, keepdims=True))
    alpha = jnp.exp(m_prev - m_new)
    p = jnp.exp(s - m_new)
    l_scr[...] = alpha * l_scr[...] + jnp.sum(p, axis=-1, keepdims=True)
    m_scr[...] = m_new

    @pl.when(kj == pl.num_programs(1) - 1)
    def _():
        lse_ref[...] = m_scr[...] + jnp.log(l_scr[...])


def _pick_sim_tile(N: int, D: int) -> int:
    # Single-tile fast path: one MXU pass, minimal (or zero) padding.
    if N <= 512:
        return _round_up(max(N, 8), 8)
    # Larger N: biggest MXU-friendly tile that (a) keeps the ~4 in-flight
    # (tile, D) blocks plus a few tile^2 f32 temporaries well inside VMEM and
    # (b) minimizes padded work.  Larger tiles also cut key-block HBM re-reads.
    budget = 20 << 20
    cands = [t for t in (512, 256) if 4 * (4 * t * D + 3 * t * t) <= budget]
    if not cands:
        cands = [128]
    return min(cands, key=lambda t: (_round_up(N, t), -t))


# ---------------------------------------------------------------------------
# Wrapper
# ---------------------------------------------------------------------------
def nt_xent_loss(z_i: jax.Array, z_j: jax.Array, temperature: float) -> jax.Array:
    """Pallas implementation of NT_Xent.forward(z_i, z_j)."""
    assert z_i.shape == z_j.shape and z_i.ndim == 2
    B, D = z_i.shape
    N = 2 * B
    inv_t = 1.0 / float(temperature)

    # ---- pass 1: normalize + positive logits (O(N*D)) ----
    tb = _pick_prep_tile(B, D)
    zn2, pos = pl.pallas_call(
        functools.partial(_prep_kernel, inv_t=inv_t),
        out_shape=(jax.ShapeDtypeStruct((2, B, D), jnp.float32),
                   jax.ShapeDtypeStruct((B, 1), jnp.float32)),
        grid_spec=pltpu.PrefetchScalarGridSpec(
            num_scalar_prefetch=0,
            grid=(pl.cdiv(B, tb),),
            in_specs=[pl.BlockSpec((tb, D), lambda b: (b, 0)),
                      pl.BlockSpec((tb, D), lambda b: (b, 0))],
            out_specs=[pl.BlockSpec((2, tb, D), lambda b: (0, b, 0)),
                       pl.BlockSpec((tb, 1), lambda b: (b, 0))]),
        compiler_params=pltpu.CompilerParams(dimension_semantics=("parallel",)),
    )(z_i, z_j)
    zn = zn2.reshape(N, D)   # (2, B, D) -> (N, D): free row-major reshape, no copy

    # ---- pass 2: tiled online-LSE over the similarity matrix ----
    tile = _pick_sim_tile(N, D)
    n_pad = _round_up(N, tile)
    if n_pad != N:
        zn = jnp.pad(zn, ((0, n_pad - N), (0, 0)))   # padded keys masked in-kernel
    grid_m = n_pad // tile

    lse = pl.pallas_call(
        functools.partial(_lse_kernel, inv_t=inv_t, tile=tile,
                          n_valid=N, n_pad=n_pad),
        out_shape=jax.ShapeDtypeStruct((n_pad, 1), jnp.float32),
        grid_spec=pltpu.PrefetchScalarGridSpec(
            num_scalar_prefetch=0,
            grid=(grid_m, grid_m),          # reduction (key) axis last
            in_specs=[pl.BlockSpec((tile, D), lambda qi, kj: (qi, 0)),
                      pl.BlockSpec((tile, D), lambda qi, kj: (kj, 0))],
            out_specs=pl.BlockSpec((tile, 1), lambda qi, kj: (qi, 0)),
            scratch_shapes=[pltpu.VMEM((tile, 1), jnp.float32),
                            pltpu.VMEM((tile, 1), jnp.float32)]),
        compiler_params=pltpu.CompilerParams(
            dimension_semantics=("parallel", "arbitrary")),
    )(zn, zn)

    # ---- tiny O(N) scalar epilogue (each pair's positive counts for 2 rows) ----
    return (jnp.sum(lse[:N, 0]) - 2.0 * jnp.sum(pos)) / jnp.float32(N)


# ---------------------------------------------------------------------------
# Pure-JAX reference mirroring the PyTorch forward exactly
# ---------------------------------------------------------------------------
def _nt_xent_ref(z_i, z_j, temperature):
    bs = z_i.shape[0]
    N = 2 * bs
    z = jnp.concatenate([z_i, z_j], axis=0)
    norm = jnp.maximum(jnp.linalg.norm(z, axis=-1, keepdims=True), 1e-8)
    zn = z / norm
    sim = (zn @ zn.T) / temperature
    idx = jnp.arange(N)
    pos = sim[idx, (idx + bs) % N]
    sim_masked = jnp.where(jnp.eye(N, dtype=bool), _NEG_BIG, sim)
    lse = jax.scipy.special.logsumexp(sim_masked, axis=-1)
    return jnp.sum(lse - pos) / N


if __name__ == "__main__":
    temperature = 0.5
    key = jax.random.PRNGKey(0)
    k1, k2, k3, k4, k5, k6 = jax.random.split(key, 6)

    def check(zi, zj):
        out = jax.block_until_ready(nt_xent_loss(zi, zj, temperature))
        ref = jax.block_until_ready(_nt_xent_ref(zi, zj, temperature))
        assert jnp.allclose(out, ref, rtol=1e-4, atol=1e-5), (out, ref)

    # Small demo shape (single-tile path, N = 8).
    check(jax.random.normal(k1, (4, 32), dtype=jnp.float32),
          jax.random.normal(k2, (4, 32), dtype=jnp.float32))

    # Mid-size single-tile path (N = 320, no padding needed).
    check(jax.random.normal(k3, (160, 64), dtype=jnp.float32),
          jax.random.normal(k4, (160, 64), dtype=jnp.float32))

    # Multi-tile + padding path (N = 528 -> padded to 768, 3x3 grid of 256 tiles).
    check(jax.random.normal(k5, (264, 64), dtype=jnp.float32),
          jax.random.normal(k6, (264, 64), dtype=jnp.float32))

    print("KERNEL_OK")
</pallas_src>

<mosaic_0001>
module attributes {stable_mosaic.version = 11 : i64} {
  func.func @_prep_kernel(%arg0: i32, %arg1: memref<4x32xf32, #tpu.memory_space<vmem>>, %arg2: memref<4x32xf32, #tpu.memory_space<vmem>>, %arg3: memref<2x4x32xf32, #tpu.memory_space<vmem>>, %arg4: memref<4x1xf32, #tpu.memory_space<vmem>>) attributes {dimension_semantics = [#tpu.dimension_semantics<parallel>], iteration_bounds = array<i64: 1>, scalar_prefetch = 0 : i64, scratch_operands = 0 : i64, tpu.core_type = #tpu.core_type<tc>, window_params = [{transform_indices = @transform_0, window_bounds = array<i64: 4, 32>}, {transform_indices = @transform_1, window_bounds = array<i64: 4, 32>}, {transform_indices = @transform_2, window_bounds = array<i64: 2, 4, 32>}, {transform_indices = @transform_3, window_bounds = array<i64: 4, 1>}]} {
    %c0 = arith.constant 0 : index
    %c0_0 = arith.constant 0 : index
    %0 = vector.load %arg1[%c0, %c0_0] : memref<4x32xf32, #tpu.memory_space<vmem>>, vector<4x32xf32>
    %c0_1 = arith.constant 0 : index
    %c0_2 = arith.constant 0 : index
    %1 = vector.load %arg2[%c0_1, %c0_2] : memref<4x32xf32, #tpu.memory_space<vmem>>, vector<4x32xf32>
    %2 = arith.mulf %0, %0 : vector<4x32xf32>
    %cst = arith.constant dense<0.000000e+00> : vector<4xf32>
    %3 = vector.multi_reduction <add>, %2, %cst [1] : vector<4x32xf32> to vector<4xf32>
    %4 = vector.shape_cast %3 : vector<4xf32> to vector<4x1xf32>
    %cst_3 = arith.constant 1.000000e-16 : f32
    %5 = vector.broadcast %cst_3 : f32 to vector<4x1xf32>
    %6 = arith.maximumf %4, %5 : vector<4x1xf32>
    %7 = math.rsqrt %6 : vector<4x1xf32>
    %8 = arith.mulf %1, %1 : vector<4x32xf32>
    %cst_4 = arith.constant dense<0.000000e+00> : vector<4xf32>
    %9 = vector.multi_reduction <add>, %8, %cst_4 [1] : vector<4x32xf32> to vector<4xf32>
    %10 = vector.shape_cast %9 : vector<4xf32> to vector<4x1xf32>
    %cst_5 = arith.constant 1.000000e-16 : f32
    %11 = vector.broadcast %cst_5 : f32 to vector<4x1xf32>
    %12 = arith.maximumf %10, %11 : vector<4x1xf32>
    %13 = math.rsqrt %12 : vector<4x1xf32>
    %14 = vector.broadcast %7 : vector<4x1xf32> to vector<4x32xf32>
    %15 = arith.mulf %0, %14 : vector<4x32xf32>
    %16 = vector.broadcast %13 : vector<4x1xf32> to vector<4x32xf32>
    %17 = arith.mulf %1, %16 : vector<4x32xf32>
    %c0_6 = arith.constant 0 : index
    %c0_7 = arith.constant 0 : index
    %c0_8 = arith.constant 0 : index
    %18 = vector.load %arg3[%c0_6, %c0_7, %c0_8] : memref<2x4x32xf32, #tpu.memory_space<vmem>>, vector<1x4x32xf32>
    %19 = vector.shape_cast %18 : vector<1x4x32xf32> to vector<4x32xf32>
    %20 = vector.shape_cast %15 : vector<4x32xf32> to vector<1x4x32xf32>
    tpu.vector_store %arg3[%c0_6, %c0_7, %c0_8], %20 {strides = array<i32>} : memref<2x4x32xf32, #tpu.memory_space<vmem>>, vector<1x4x32xf32>,
    %c1 = arith.constant 1 : index
    %c0_9 = arith.constant 0 : index
    %c0_10 = arith.constant 0 : index
    %21 = vector.load %arg3[%c1, %c0_9, %c0_10] : memref<2x4x32xf32, #tpu.memory_space<vmem>>, vector<1x4x32xf32>
    %22 = vector.shape_cast %21 : vector<1x4x32xf32> to vector<4x32xf32>
    %23 = vector.shape_cast %17 : vector<4x32xf32> to vector<1x4x32xf32>
    tpu.vector_store %arg3[%c1, %c0_9, %c0_10], %23 {strides = array<i32>} : memref<2x4x32xf32, #tpu.memory_space<vmem>>, vector<1x4x32xf32>,
    %24 = arith.mulf %15, %17 : vector<4x32xf32>
    %cst_11 = arith.constant dense<0.000000e+00> : vector<4xf32>
    %25 = vector.multi_reduction <add>, %24, %cst_11 [1] : vector<4x32xf32> to vector<4xf32>
    %26 = vector.shape_cast %25 : vector<4xf32> to vector<4x1xf32>
    %cst_12 = arith.constant 2.000000e+00 : f32
    %27 = vector.broadcast %cst_12 : f32 to vector<4x1xf32>
    %28 = arith.mulf %26, %27 : vector<4x1xf32>
    %c0_13 = arith.constant 0 : index
    %c0_14 = arith.constant 0 : index
    %29 = vector.load %arg4[%c0_13, %c0_14] : memref<4x1xf32, #tpu.memory_space<vmem>>, vector<4x1xf32>
    tpu.vector_store %arg4[%c0_13, %c0_14], %28 {strides = array<i32>} : memref<4x1xf32, #tpu.memory_space<vmem>>, vector<4x1xf32>,
    return
  }
  func.func @transform_0(%arg0: i32) -> (i32, i32) {
    %c0_i32 = arith.constant 0 : i32
    %c0_i32_0 = arith.constant 0 : i32
    return %arg0, %c0_i32 : i32, i32
  }
  func.func @transform_1(%arg0: i32) -> (i32, i32) {
    %c0_i32 = arith.constant 0 : i32
    %c0_i32_0 = arith.constant 0 : i32
    return %arg0, %c0_i32 : i32, i32
  }
  func.func @transform_2(%arg0: i32) -> (i32, i32, i32) {
    %c0_i32 = arith.constant 0 : i32
    %c0_i32_0 = arith.constant 0 : i32
    %c0_i32_1 = arith.constant 0 : i32
    return %c0_i32, %arg0, %c0_i32_0 : i32, i32, i32
  }
  func.func @transform_3(%arg0: i32) -> (i32, i32) {
    %c0_i32 = arith.constant 0 : i32
    %c0_i32_0 = arith.constant 0 : i32
    return %arg0, %c0_i32 : i32, i32
  }
}

</mosaic_0001>

<llo_original>
// kernel: tpu_custom_call.1
$region0: #{tpu_custom_call.1}
  #allocation0 [shape = 'u32[]', space=smem, size = 0x4, offset = 0x4, fixed_abs, tag = 'smem constant byte address 0x4 - core index']
  #allocation1 [shape = 'u32[144,128]{1,0:T(1,128)}', space=vmem, size = 0x12000, scoped, tag = 'internal scratch']
  %s0 = inlined_call_operand.hbm [shape: f32[4,32], index: 0, kind: input, shape index: {}]
  %s1 = inlined_call_operand.hbm [shape: f32[4,32], index: 1, kind: input, shape index: {}]
  %s2 = inlined_call_operand.hbm [shape: f32[2,4,32], index: 2, kind: output, shape index: {0}]
  %s3 = inlined_call_operand.vmem [shape: f32[4,1], index: 3, kind: output, shape index: {1}]
  %4 = xla_tuple %s2, %s3
  %s5 = sld [smem:[#allocation0]]
  $region34: #{tpu_custom_call.1} parent=0
    _
  %s7 = ssub.s32 1, %s5
  %s8 = scalar_select 0, %s7, %s5
  $region1: #{tpu_custom_call.1} parent=0
    #allocation2 [shape = 'u8[2048]{0}', space=vmem, size = 0x800, scoped, tag = 'input window, operand 0, single buffered']
    #allocation3 [shape = 's32[1]{0}', space=sflag, size = 0x4, scoped, tag = 'scoped memory for tpu_custom_call.1']
    #allocation4 [shape = 's32[1]{0}', space=sflag, size = 0x4, scoped, tag = 'scoped memory for tpu_custom_call.1']
    #allocation5 [shape = 'u8[2048]{0}', space=vmem, size = 0x800, scoped, tag = 'input window, operand 1, single buffered']
    #allocation6 [shape = 's32[1]{0}', space=sflag, size = 0x4, scoped, tag = 'scoped memory for tpu_custom_call.1']
    #allocation7 [shape = 'u8[4096]{0}', space=vmem, size = 0x1000, scoped, tag = 'output window, operand 0, single buffered']
    %9 = vsyncpa [#allocation3], 0
    %10 = vsyncpa [#allocation6], 0
    %11 = vsyncpa [#allocation4], 0
    // Predicated region
    $region2: #{tpu_custom_call.1} parent=1 // pred_check
      _
    $region3: #{tpu_custom_call.1} parent=1 // pred_check_branch
      %13 = sbr.rel (0) target = $region5
    $region4: #{tpu_custom_call.1} parent=1 // pred_region
      %s15 = ssub.s32 64, 64
      %16 = vsyncadd [#allocation3], %s15
      %s18 = sshll.u32 [#allocation2], 4
      %s19 = int_to_ptr.vmem [resolvable:$true] %s18
      %21 = dma.hbm_to_vmem [thread:$0]  %s0, 64, %s19, [#allocation3]
    $region5: #{tpu_custom_call.1} parent=1 // pred_fallthru
      _
    // Predicated region
    $region6: #{tpu_custom_call.1} parent=1 // pred_check
      _
    $region7: #{tpu_custom_call.1} parent=1 // pred_check_branch
      %23 = sbr.rel (0) target = $region9
    $region8: #{tpu_custom_call.1} parent=1 // pred_region
      %s25 = ssub.s32 64, 64
      %26 = vsyncadd [#allocation6], %s25
      %s28 = sshll.u32 [#allocation5], 4
      %s29 = int_to_ptr.vmem [resolvable:$true] %s28
      %31 = dma.hbm_to_vmem [thread:$0]  %s1, 64, %s29, [#allocation6]
    $region9: #{tpu_custom_call.1} parent=1 // pred_fallthru
      _
    // Predicated region
    $region10: #{tpu_custom_call.1} parent=1 // pred_check
      _
    $region11: #{tpu_custom_call.1} parent=1 // pred_check_branch
      %33 = sbr.rel (0) target = $region13
    $region12: #{tpu_custom_call.1} parent=1 // pred_region
      %34 = dma.done [#allocation3], 64
    $region13: #{tpu_custom_call.1} parent=1 // pred_fallthru
      _
    // Predicated region
    $region14: #{tpu_custom_call.1} parent=1 // pred_check
      _
    $region15: #{tpu_custom_call.1} parent=1 // pred_check_branch
      %36 = sbr.rel (0) target = $region17
    $region16: #{tpu_custom_call.1} parent=1 // pred_region
      %37 = dma.done [#allocation6], 64
    $region17: #{tpu_custom_call.1} parent=1 // pred_fallthru
      _
    %v38 = vld [vmem:[#allocation2] sm:$0xf]
    %v39 = vld [vmem:[#allocation5] sm:$0xf]
    %v40 = vmul.f32 %v38, %v38
    %vm41 = vcmask 257024
    %v42 = vsel %vm41, %v40, 0.0
    %43 = vadd.xlane.f32.xlu0 %v42
    %v44 = vpop.xlane.xlu0 %43
    %v45 = vmax.f32 %v44, 1e-16
    %v46 = vrsqrt.pop %v45
    %v47 = vmul.f32 %v39, %v39
    %v48 = vsel %vm41, %v47, 0.0
    %49 = vadd.xlane.f32.xlu0 %v48
    %v50 = vpop.xlane.xlu0 %49
    %v51 = vmax.f32 %v50, 1e-16
    %v52 = vrsqrt.pop %v51
    %v53 = vmul.f32 %v38, %v46
    %v54 = vmul.f32 %v39, %v52
    %55 = vst.msk [vmem:[#allocation7] sm:$0xf] %vm41, %v53
    %s56 = scalar_lea.vmem [#allocation7], 4
    %57 = vst.msk [vmem:[%s56] sm:$0xf] %vm41, %v54
    %v58 = vmul.f32 %v53, %v54
    %v59 = vsel %vm41, %v58, 0.0
    %60 = vadd.xlane.f32.xlu0 %v59
    %v61 = vpop.xlane.xlu0 %60
    %v62 = vmul.f32 %v61, 2.0
    %vm63 = vcmask 3072
    %64 = vst.msk [vmem:[%s3] sm:$0xf] %vm63, %v62
    // Predicated region
    $region18: #{tpu_custom_call.1} parent=1 // pred_check
      _
    $region19: #{tpu_custom_call.1} parent=1 // pred_check_branch
      %66 = sbr.rel (0) target = $region21
    $region20: #{tpu_custom_call.1} parent=1 // pred_region
      %s68 = ssub.s32 128, 128
      %69 = vsyncadd [#allocation4], %s68
      %s70 = sshll.u32 [#allocation7], 4
      %s71 = int_to_ptr.vmem [resolvable:$true] %s70
      %76 = dma.vmem_to_hbm [thread:$0]  %s71, 128, %s2, [#allocation4], 64, 64, 4
    $region21: #{tpu_custom_call.1} parent=1 // pred_fallthru
      _
    // Predicated region
    $region22: #{tpu_custom_call.1} parent=1 // pred_check
      _
    $region23: #{tpu_custom_call.1} parent=1 // pred_check_branch
      %78 = sbr.rel (0) target = $region25
    $region24: #{tpu_custom_call.1} parent=1 // pred_region
      _
    $region25: #{tpu_custom_call.1} parent=1 // pred_fallthru
      _
    // Predicated region
    $region26: #{tpu_custom_call.1} parent=1 // pred_check
      _
    $region27: #{tpu_custom_call.1} parent=1 // pred_check_branch
      %80 = sbr.rel (0) target = $region29
    $region28: #{tpu_custom_call.1} parent=1 // pred_region
      %81 = dma.done [#allocation4], 128
    $region29: #{tpu_custom_call.1} parent=1 // pred_fallthru
      _
    // Predicated region
    $region30: #{tpu_custom_call.1} parent=1 // pred_check
      _
    $region31: #{tpu_custom_call.1} parent=1 // pred_check_branch
      %83 = sbr.rel (0) target = $region33
    $region32: #{tpu_custom_call.1} parent=1 // pred_region
      _
    $region33: #{tpu_custom_call.1} parent=1 // pred_fallthru
      _
    %84 = vsyncpa [#allocation3], 1
    %85 = vsyncpa [#allocation6], 1
    %86 = vsyncpa [#allocation4], 1

</llo_original>
